<compile_context>
chip_gen: v6e
topology: v6e:2x2x1
jax: 0.10.0
libtpu: 0.0.40
codegen_flags: <defaults>
</compile_context>

<pallas_src>
import functools

import numpy as np

import jax
import jax.numpy as jnp
from jax import lax
from jax.experimental import pallas as pl
from jax.experimental.pallas import tpu as pltpu

LEAK = 0.1
BN_EPS = 1e-5


def _lrelu(v):
    return jnp.where(v > 0, v, LEAK * v)


def _round_up(x, m):
    return (x + m - 1) // m * m


# ----------------------------------------------------------------------------
# Fused decoder kernel: one grid step == one image, everything stays on-chip.
# ----------------------------------------------------------------------------
def _decoder_fused_kernel(x_ref, w1_ref, b1_ref, w2_ref, b2_ref, w3_ref, b3_ref,
                          m_ref, o_ref, *, W, HW):
    # conv1: 1x1 conv + BN + LeakyReLU, channel-major (mid_pad, H*W) -- lane-dense.
    y = _lrelu(jnp.dot(w1_ref[...], x_ref[...],
                       preferred_element_type=jnp.float32) + b1_ref[...])

    # Neighbours needed by the 4 output parities of the stride-2 transposed conv:
    # y[m, n+1], y[m+1, n], y[m+1, n+1].  One XLU roll each, multiplied by a
    # precomputed 0/1 boundary mask (the mask also kills the wrapped lanes).
    y01 = pltpu.roll(y, HW - 1,     axis=1) * m_ref[0]      # y[m,   n+1]
    y10 = pltpu.roll(y, HW - W,     axis=1) * m_ref[1]      # y[m+1, n  ]
    y11 = pltpu.roll(y, HW - W - 1, axis=1) * m_ref[2]      # y[m+1, n+1]
    ystack = jnp.concatenate([y, y01, y10, y11], axis=0)    # (4*mid_pad, HW), 8-aligned

    # tp_conv: all 4 parities with ONE MXU contraction (depth 4*mid_pad) + BN + LReLU.
    z = _lrelu(jnp.dot(w2_ref[...], ystack,
                       preferred_element_type=jnp.float32) + b2_ref[...])

    # conv2: 1x1 conv on every parity (block-diagonal weights) + BN + LeakyReLU.
    o = _lrelu(jnp.dot(w3_ref[...], z,
                       preferred_element_type=jnp.float32) + b3_ref[...])
    o_ref[...] = o.astype(o_ref.dtype)   # rows = parity*out_ch_pad + c, lanes = H*W


def decoder_pallas(x_nchw, fp, *, out_ch):
    N, Cin, H, W = x_nchw.shape
    HW = H * W                             # NOTE: keep H*W a multiple of 128 for
    midp = fp["w1"].shape[0]               # unmasked lane-dense stores (256 here).
    out4p = fp["w3"].shape[0]              # 4 * out_ch_pad
    outp = out4p // 4
    x = x_nchw.reshape(N, Cin, HW)         # free reshape; stays channel-major NCHW

    # Precomputed boundary masks (trace-time constants, resident in VMEM):
    #   m[0]: column n < W-1 (valid y[m, n+1]); m[1]: row m < H-1; m[2]: both.
    col = np.arange(HW, dtype=np.int64) % W
    row = np.arange(HW, dtype=np.int64) // W
    m01 = (col < W - 1).astype(np.float32)
    m10 = (row < H - 1).astype(np.float32)
    masks = jnp.asarray(np.broadcast_to(
        np.stack([m01, m10, m01 * m10])[:, None, :], (3, midp, HW)))

    o = pl.pallas_call(
        functools.partial(_decoder_fused_kernel, W=W, HW=HW),
        out_shape=jax.ShapeDtypeStruct((N, out4p, HW), x_nchw.dtype),
        grid=(N,),
        in_specs=[
            pl.BlockSpec((None, Cin, HW), lambda n: (n, 0, 0)),
            pl.BlockSpec(fp["w1"].shape, lambda n: (0, 0)),
            pl.BlockSpec(fp["b1"].shape, lambda n: (0, 0)),
            pl.BlockSpec(fp["w2"].shape, lambda n: (0, 0)),
            pl.BlockSpec(fp["b2"].shape, lambda n: (0, 0)),
            pl.BlockSpec(fp["w3"].shape, lambda n: (0, 0)),
            pl.BlockSpec(fp["b3"].shape, lambda n: (0, 0)),
            pl.BlockSpec(masks.shape, lambda n: (0, 0, 0)),
        ],
        out_specs=pl.BlockSpec((None, out4p, HW), lambda n: (n, 0, 0)),
        compiler_params=pltpu.CompilerParams(dimension_semantics=("parallel",)),
    )(x, fp["w1"], fp["b1"], fp["w2"], fp["b2"], fp["w3"], fp["b3"], masks)

    # De-interleave the 4 parity phases into (N, out_ch, 2H, 2W).  One tiny XLA
    # transpose on the final 64 KB output; all intermediates stayed in VMEM.
    o = o.reshape(N, 2, 2, outp, H, W)[:, :, :, :out_ch]    # (n, ph, pw, c, h, w)
    o = jnp.transpose(o, (0, 3, 4, 1, 5, 2))                # (n, c, h, ph, w, pw)
    return o.reshape(N, out_ch, 2 * H, 2 * W)


# ----------------------------------------------------------------------------
# Parameters: raw PyTorch-layout weights + eval-mode BN stats; folding helpers.
# ----------------------------------------------------------------------------
def bn_fold(gamma, beta, mean, var, eps=BN_EPS):
    scale = gamma / jnp.sqrt(var + eps)
    return scale, beta - mean * scale


def make_decoder_params(key, in_ch, out_ch, kernel_size):
    mid = in_ch // 4
    ks = jax.random.split(key, 6)

    def bn_params(k, c):
        k1, k2, k3, k4 = jax.random.split(k, 4)
        return (0.5 + jax.random.uniform(k1, (c,), jnp.float32),
                0.1 * jax.random.normal(k2, (c,), jnp.float32),
                0.1 * jax.random.normal(k3, (c,), jnp.float32),
                0.5 + jax.random.uniform(k4, (c,), jnp.float32))

    return dict(
        conv1_w=0.1 * jax.random.normal(ks[0], (mid, in_ch), jnp.float32),     # (out,in) 1x1
        tp_w=0.1 * jax.random.normal(ks[1], (mid, mid, kernel_size, kernel_size),
                                     jnp.float32),                             # (in,out,kh,kw)
        conv2_w=0.1 * jax.random.normal(ks[2], (out_ch, mid), jnp.float32),    # (out,in) 1x1
        bn1=bn_params(ks[3], mid),
        bn2=bn_params(ks[4], mid),
        bn3=bn_params(ks[5], out_ch),
    )


def build_fused_params(raw, *, kernel_size, stride, padding, output_padding):
    assert (kernel_size, stride, padding, output_padding) == (3, 2, 1, 1), (
        "fused decoder kernel is specialised to the LinkNet config (3, 2, 1, 1)")
    s1, t1 = bn_fold(*raw["bn1"])
    s2, t2 = bn_fold(*raw["bn2"])
    s3, t3 = bn_fold(*raw["bn3"])
    mid, in_ch = raw["conv1_w"].shape
    out_ch = raw["conv2_w"].shape[0]
    midp = _round_up(mid, 8)                 # 8-sublane aligned phase slabs
    outp = _round_up(out_ch, 8)

    # conv1 (+BN1), zero-padded to midp rows (padded rows stay exactly 0 downstream).
    w1 = jnp.zeros((midp, in_ch), jnp.float32).at[:mid].set(raw["conv1_w"] * s1[:, None])
    b1 = jnp.zeros((midp, 1), jnp.float32).at[:mid, 0].set(t1)

    tp = raw["tp_w"]                          # (ci, co, kh, kw)

    def tap(kh, kw):                          # (co, ci) with BN2 scale folded, padded
        t = tp[:, :, kh, kw].T * s2[:, None]
        return jnp.zeros((midp, midp), jnp.float32).at[:mid, :mid].set(t)

    Z = jnp.zeros((midp, midp), jnp.float32)

    def phase_row(blocks):                    # blocks act on [y, y01, y10, y11]
        return jnp.concatenate(blocks, axis=1)

    # out[2m+ph, 2n+pw] = sum of taps on y[m,n], y[m,n+1], y[m+1,n], y[m+1,n+1]
    w2 = jnp.concatenate([
        phase_row([tap(1, 1), Z,          Z,          Z         ]),   # (even, even)
        phase_row([tap(1, 2), tap(1, 0),  Z,          Z         ]),   # (even, odd )
        phase_row([tap(2, 1), Z,          tap(0, 1),  Z         ]),   # (odd , even)
        phase_row([tap(2, 2), tap(2, 0),  tap(0, 2),  tap(0, 0) ]),   # (odd , odd )
    ], axis=0)                                # (4*midp, 4*midp)
    b2 = jnp.zeros((4 * midp, 1), jnp.float32)
    for p in range(4):
        b2 = b2.at[p * midp:p * midp + mid, 0].set(t2)

    # conv2 (+BN3), block-diagonal over the 4 parities, padded channels.
    w3c = jnp.zeros((outp, midp), jnp.float32).at[:out_ch, :mid].set(
        raw["conv2_w"] * s3[:, None])
    w3 = jnp.kron(jnp.eye(4, dtype=jnp.float32), w3c)   # (4*outp, 4*midp) block-diag
    b3 = jnp.zeros((4 * outp, 1), jnp.float32)
    for p in range(4):
        b3 = b3.at[p * outp:p * outp + out_ch, 0].set(t3)
    return dict(w1=w1, b1=b1, w2=w2, b2=b2, w3=w3, b3=b3)


# ----------------------------------------------------------------------------
# Pure-XLA reference (for the numerical check)
# ----------------------------------------------------------------------------
def decoder_reference(x_nchw, raw, *, kernel_size, stride, padding, output_padding):
    s1, t1 = bn_fold(*raw["bn1"])
    s2, t2 = bn_fold(*raw["bn2"])
    s3, t3 = bn_fold(*raw["bn3"])
    dn = ("NHWC", "HWIO", "NHWC")
    hp = lax.Precision.HIGHEST
    x = jnp.transpose(x_nchw, (0, 2, 3, 1))

    w1 = (raw["conv1_w"].T * s1[None, :])[None, None]
    y = _lrelu(lax.conv_general_dilated(x, w1, (1, 1), "VALID",
                                        dimension_numbers=dn, precision=hp)
               + t1[None, None, None, :])

    K = kernel_size
    w2 = jnp.transpose(raw["tp_w"][:, :, ::-1, ::-1], (2, 3, 0, 1)) * s2[None, None, None, :]
    lo = K - 1 - padding
    hi = K - 1 - padding + output_padding
    z = _lrelu(lax.conv_general_dilated(y, w2, (1, 1), padding=[(lo, hi), (lo, hi)],
                                        lhs_dilation=(stride, stride),
                                        dimension_numbers=dn, precision=hp)
               + t2[None, None, None, :])

    w3 = (raw["conv2_w"].T * s3[None, :])[None, None]
    o = _lrelu(lax.conv_general_dilated(z, w3, (1, 1), "VALID",
                                        dimension_numbers=dn, precision=hp)
               + t3[None, None, None, :])
    return jnp.transpose(o, (0, 3, 1, 2))


# ----------------------------------------------------------------------------
if __name__ == "__main__":
    # Decoder(in_ch=16, out_ch=8, kernel_size=3, stride=2, padding=1, output_padding=1)
    N, in_ch, H, W = 2, 16, 16, 16
    out_ch, K, stride, pad, out_pad = 8, 3, 2, 1, 1

    key = jax.random.PRNGKey(0)
    kx, kp = jax.random.split(key)
    x = jax.random.normal(kx, (N, in_ch, H, W), jnp.float32)      # NCHW, like PyTorch
    raw = make_decoder_params(kp, in_ch, out_ch, K)
    fused = build_fused_params(raw, kernel_size=K, stride=stride,
                               padding=pad, output_padding=out_pad)

    fwd = jax.jit(functools.partial(decoder_pallas, out_ch=out_ch))
    out = fwd(x, fused)
    jax.block_until_ready(out)

    ref = decoder_reference(x, raw, kernel_size=K, stride=stride,
                            padding=pad, output_padding=out_pad)
    assert out.shape == (N, out_ch, 2 * H, 2 * W), out.shape
    assert jnp.allclose(out, ref, atol=1e-2, rtol=1e-2), \
        float(jnp.max(jnp.abs(out - ref)))

    print("KERNEL_OK")
</pallas_src>

<mosaic_0001>
module attributes {stable_mosaic.version = 11 : i64} {
  func.func @_decoder_fused_kernel(%arg0: i32, %arg1: memref<1x16x256xf32, #tpu.memory_space<vmem>>, %arg2: memref<8x16xf32, #tpu.memory_space<vmem>>, %arg3: memref<8x1xf32, #tpu.memory_space<vmem>>, %arg4: memref<32x32xf32, #tpu.memory_space<vmem>>, %arg5: memref<32x1xf32, #tpu.memory_space<vmem>>, %arg6: memref<32x32xf32, #tpu.memory_space<vmem>>, %arg7: memref<32x1xf32, #tpu.memory_space<vmem>>, %arg8: memref<3x8x256xf32, #tpu.memory_space<vmem>>, %arg9: memref<1x32x256xf32, #tpu.memory_space<vmem>>) attributes {dimension_semantics = [#tpu.dimension_semantics<parallel>], iteration_bounds = array<i64: 2>, scalar_prefetch = 0 : i64, scratch_operands = 0 : i64, tpu.core_type = #tpu.core_type<tc>, window_params = [{transform_indices = @transform_0, window_bounds = array<i64: 1, 16, 256>}, {pipeline_mode = #tpu.pipeline_mode<synchronous>, transform_indices = @transform_1, window_bounds = array<i64: 8, 16>}, {pipeline_mode = #tpu.pipeline_mode<synchronous>, transform_indices = @transform_2, window_bounds = array<i64: 8, 1>}, {pipeline_mode = #tpu.pipeline_mode<synchronous>, transform_indices = @transform_3, window_bounds = array<i64: 32, 32>}, {pipeline_mode = #tpu.pipeline_mode<synchronous>, transform_indices = @transform_4, window_bounds = array<i64: 32, 1>}, {pipeline_mode = #tpu.pipeline_mode<synchronous>, transform_indices = @transform_5, window_bounds = array<i64: 32, 32>}, {pipeline_mode = #tpu.pipeline_mode<synchronous>, transform_indices = @transform_6, window_bounds = array<i64: 32, 1>}, {pipeline_mode = #tpu.pipeline_mode<synchronous>, transform_indices = @transform_7, window_bounds = array<i64: 3, 8, 256>}, {transform_indices = @transform_8, window_bounds = array<i64: 1, 32, 256>}]} {
    %c0 = arith.constant 0 : index
    %c0_0 = arith.constant 0 : index
    %0 = vector.load %arg2[%c0, %c0_0] : memref<8x16xf32, #tpu.memory_space<vmem>>, vector<8x16xf32>
    %c0_1 = arith.constant 0 : index
    %c0_2 = arith.constant 0 : index
    %c0_3 = arith.constant 0 : index
    %1 = vector.load %arg1[%c0_1, %c0_2, %c0_3] : memref<1x16x256xf32, #tpu.memory_space<vmem>>, vector<1x16x256xf32>
    %2 = vector.shape_cast %1 : vector<1x16x256xf32> to vector<16x256xf32>
    %cst = arith.constant dense<0.000000e+00> : vector<8x256xf32>
    %3 = tpu.matmul %0, %2, %cst {dimension_numbers = #tpu.dot_dimension_numbers<[1], [0], [0], [1], [0, 0, 1, 1], [], []>} : vector<8x16xf32>, vector<16x256xf32>, vector<8x256xf32> -> vector<8x256xf32>
    %c0_4 = arith.constant 0 : index
    %c0_5 = arith.constant 0 : index
    %4 = vector.load %arg3[%c0_4, %c0_5] : memref<8x1xf32, #tpu.memory_space<vmem>>, vector<8x1xf32>
    %5 = vector.broadcast %4 : vector<8x1xf32> to vector<8x256xf32>
    %6 = arith.addf %3, %5 : vector<8x256xf32>
    %cst_6 = arith.constant 0.000000e+00 : f32
    %7 = vector.broadcast %cst_6 : f32 to vector<8x256xf32>
    %8 = arith.cmpf ogt, %6, %7 : vector<8x256xf32>
    %cst_7 = arith.constant 1.000000e-01 : f32
    %9 = vector.broadcast %cst_7 : f32 to vector<8x256xf32>
    %10 = arith.mulf %9, %6 : vector<8x256xf32>
    %11 = arith.select %8, %6, %10 : vector<8x256xi1>, vector<8x256xf32>
    %c255_i32 = arith.constant 255 : i32
    %12 = tpu.dynamic_rotate %11 by %c255_i32 dim 1 : vector<8x256xf32>, i32 -> vector<8x256xf32>
    %c0_8 = arith.constant 0 : index
    %c0_9 = arith.constant 0 : index
    %c0_10 = arith.constant 0 : index
    %13 = vector.load %arg8[%c0_8, %c0_9, %c0_10] : memref<3x8x256xf32, #tpu.memory_space<vmem>>, vector<1x8x256xf32>
    %14 = vector.shape_cast %13 : vector<1x8x256xf32> to vector<8x256xf32>
    %15 = arith.mulf %12, %14 : vector<8x256xf32>
    %c240_i32 = arith.constant 240 : i32
    %16 = tpu.dynamic_rotate %11 by %c240_i32 dim 1 : vector<8x256xf32>, i32 -> vector<8x256xf32>
    %c1 = arith.constant 1 : index
    %c0_11 = arith.constant 0 : index
    %c0_12 = arith.constant 0 : index
    %17 = vector.load %arg8[%c1, %c0_11, %c0_12] : memref<3x8x256xf32, #tpu.memory_space<vmem>>, vector<1x8x256xf32>
    %18 = vector.shape_cast %17 : vector<1x8x256xf32> to vector<8x256xf32>
    %19 = arith.mulf %16, %18 : vector<8x256xf32>
    %c239_i32 = arith.constant 239 : i32
    %20 = tpu.dynamic_rotate %11 by %c239_i32 dim 1 : vector<8x256xf32>, i32 -> vector<8x256xf32>
    %c2 = arith.constant 2 : index
    %c0_13 = arith.constant 0 : index
    %c0_14 = arith.constant 0 : index
    %21 = vector.load %arg8[%c2, %c0_13, %c0_14] : memref<3x8x256xf32, #tpu.memory_space<vmem>>, vector<1x8x256xf32>
    %22 = vector.shape_cast %21 : vector<1x8x256xf32> to vector<8x256xf32>
    %23 = arith.mulf %20, %22 : vector<8x256xf32>
    %24 = tpu.concatenate %11, %15, %19, %23 in 0 : vector<8x256xf32>, vector<8x256xf32>, vector<8x256xf32>, vector<8x256xf32> -> vector<32x256xf32>
    %c0_15 = arith.constant 0 : index
    %c0_16 = arith.constant 0 : index
    %25 = vector.load %arg4[%c0_15, %c0_16] : memref<32x32xf32, #tpu.memory_space<vmem>>, vector<32x32xf32>
    %cst_17 = arith.constant dense<0.000000e+00> : vector<32x256xf32>
    %26 = tpu.matmul %25, %24, %cst_17 {dimension_numbers = #tpu.dot_dimension_numbers<[1], [0], [0], [1], [0, 0, 1, 1], [], []>} : vector<32x32xf32>, vector<32x256xf32>, vector<32x256xf32> -> vector<32x256xf32>
    %c0_18 = arith.constant 0 : index
    %c0_19 = arith.constant 0 : index
    %27 = vector.load %arg5[%c0_18, %c0_19] : memref<32x1xf32, #tpu.memory_space<vmem>>, vector<32x1xf32>
    %28 = vector.broadcast %27 : vector<32x1xf32> to vector<32x256xf32>
    %29 = arith.addf %26, %28 : vector<32x256xf32>
    %cst_20 = arith.constant 0.000000e+00 : f32
    %30 = vector.broadcast %cst_20 : f32 to vector<32x256xf32>
    %31 = arith.cmpf ogt, %29, %30 : vector<32x256xf32>
    %cst_21 = arith.constant 1.000000e-01 : f32
    %32 = vector.broadcast %cst_21 : f32 to vector<32x256xf32>
    %33 = arith.mulf %32, %29 : vector<32x256xf32>
    %34 = arith.select %31, %29, %33 : vector<32x256xi1>, vector<32x256xf32>
    %c0_22 = arith.constant 0 : index
    %c0_23 = arith.constant 0 : index
    %35 = vector.load %arg6[%c0_22, %c0_23] : memref<32x32xf32, #tpu.memory_space<vmem>>, vector<32x32xf32>
    %cst_24 = arith.constant dense<0.000000e+00> : vector<32x256xf32>
    %36 = tpu.matmul %35, %34, %cst_24 {dimension_numbers = #tpu.dot_dimension_numbers<[1], [0], [0], [1], [0, 0, 1, 1], [], []>} : vector<32x32xf32>, vector<32x256xf32>, vector<32x256xf32> -> vector<32x256xf32>
    %c0_25 = arith.constant 0 : index
    %c0_26 = arith.constant 0 : index
    %37 = vector.load %arg7[%c0_25, %c0_26] : memref<32x1xf32, #tpu.memory_space<vmem>>, vector<32x1xf32>
    %38 = vector.broadcast %37 : vector<32x1xf32> to vector<32x256xf32>
    %39 = arith.addf %36, %38 : vector<32x256xf32>
    %cst_27 = arith.constant 0.000000e+00 : f32
    %40 = vector.broadcast %cst_27 : f32 to vector<32x256xf32>
    %41 = arith.cmpf ogt, %39, %40 : vector<32x256xf32>
    %cst_28 = arith.constant 1.000000e-01 : f32
    %42 = vector.broadcast %cst_28 : f32 to vector<32x256xf32>
    %43 = arith.mulf %42, %39 : vector<32x256xf32>
    %44 = arith.select %41, %39, %43 : vector<32x256xi1>, vector<32x256xf32>
    %c0_29 = arith.constant 0 : index
    %c0_30 = arith.constant 0 : index
    %c0_31 = arith.constant 0 : index
    %45 = vector.load %arg9[%c0_29, %c0_30, %c0_31] : memref<1x32x256xf32, #tpu.memory_space<vmem>>, vector<1x32x256xf32>
    %46 = vector.shape_cast %45 : vector<1x32x256xf32> to vector<32x256xf32>
    %47 = vector.shape_cast %44 : vector<32x256xf32> to vector<1x32x256xf32>
    tpu.vector_store %arg9[%c0_29, %c0_30, %c0_31], %47 {strides = array<i32>} : memref<1x32x256xf32, #tpu.memory_space<vmem>>, vector<1x32x256xf32>,
    return
  }
  func.func @transform_0(%arg0: i32) -> (i32, i32, i32) {
    %c0_i32 = arith.constant 0 : i32
    %c0_i32_0 = arith.constant 0 : i32
    %c0_i32_1 = arith.constant 0 : i32
    return %arg0, %c0_i32, %c0_i32_0 : i32, i32, i32
  }
  func.func @transform_1(%arg0: i32) -> (i32, i32) {
    %c0_i32 = arith.constant 0 : i32
    %c0_i32_0 = arith.constant 0 : i32
    %c0_i32_1 = arith.constant 0 : i32
    return %c0_i32, %c0_i32_0 : i32, i32
  }
  func.func @transform_2(%arg0: i32) -> (i32, i32) {
    %c0_i32 = arith.constant 0 : i32
    %c0_i32_0 = arith.constant 0 : i32
    %c0_i32_1 = arith.constant 0 : i32
    return %c0_i32, %c0_i32_0 : i32, i32
  }
  func.func @transform_3(%arg0: i32) -> (i32, i32) {
    %c0_i32 = arith.constant 0 : i32
    %c0_i32_0 = arith.constant 0 : i32
    %c0_i32_1 = arith.constant 0 : i32
    return %c0_i32, %c0_i32_0 : i32, i32
  }
  func.func @transform_4(%arg0: i32) -> (i32, i32) {
    %c0_i32 = arith.constant 0 : i32
    %c0_i32_0 = arith.constant 0 : i32
    %c0_i32_1 = arith.constant 0 : i32
    return %c0_i32, %c0_i32_0 : i32, i32
  }
  func.func @transform_5(%arg0: i32) -> (i32, i32) {
    %c0_i32 = arith.constant 0 : i32
    %c0_i32_0 = arith.constant 0 : i32
    %c0_i32_1 = arith.constant 0 : i32
    return %c0_i32, %c0_i32_0 : i32, i32
  }
  func.func @transform_6(%arg0: i32) -> (i32, i32) {
    %c0_i32 = arith.constant 0 : i32
    %c0_i32_0 = arith.constant 0 : i32
    %c0_i32_1 = arith.constant 0 : i32
    return %c0_i32, %c0_i32_0 : i32, i32
  }
  func.func @transform_7(%arg0: i32) -> (i32, i32, i32) {
    %c0_i32 = arith.constant 0 : i32
    %c0_i32_0 = arith.constant 0 : i32
    %c0_i32_1 = arith.constant 0 : i32
    %c0_i32_2 = arith.constant 0 : i32
    return %c0_i32, %c0_i32_0, %c0_i32_1 : i32, i32, i32
  }
  func.func @transform_8(%arg0: i32) -> (i32, i32, i32) {
    %c0_i32 = arith.constant 0 : i32
    %c0_i32_0 = arith.constant 0 : i32
    %c0_i32_1 = arith.constant 0 : i32
    return %arg0, %c0_i32, %c0_i32_0 : i32, i32, i32
  }
}

</mosaic_0001>

<llo_original>
// kernel: decoder_pallas.1
$region0: #{decoder_pallas.1}
  #allocation0 [shape = 'u32[]', space=smem, size = 0x4, offset = 0x4, fixed_abs, tag = 'smem constant byte address 0x4 - core index']
  #allocation1 [shape = 'u32[144,128]{1,0:T(1,128)}', space=vmem, size = 0x12000, scoped, tag = 'internal scratch']
  %s0 = inlined_call_operand.vmem [shape: f32[2,16,256], index: 0, kind: input, shape index: {}]
  %s1 = inlined_call_operand.vmem [shape: f32[8,16], index: 1, kind: input, shape index: {}]
  %s2 = inlined_call_operand.vmem [shape: f32[8,1], index: 2, kind: input, shape index: {}]
  %s3 = inlined_call_operand.vmem [shape: f32[32,32], index: 3, kind: input, shape index: {}]
  %s4 = inlined_call_operand.vmem [shape: f32[32,1], index: 4, kind: input, shape index: {}]
  %s5 = inlined_call_operand.vmem [shape: f32[32,32], index: 5, kind: input, shape index: {}]
  %s6 = inlined_call_operand.vmem [shape: f32[32,1], index: 6, kind: input, shape index: {}]
  %s7 = inlined_call_operand.vmem [shape: f32[3,8,256], index: 7, kind: input, shape index: {}]
  %s8 = inlined_call_operand.vmem [shape: f32[2,32,256], index: 8, kind: output, shape index: {}]
  %s9 = sld [smem:[#allocation0]]
  $region65: #{decoder_pallas.1} parent=0
    _
  %s11 = ssub.s32 1, %s9
  %s12 = scalar_select 0, %s11, %s9
  loop: start=0, step=1, limit=4
  $region2: #{decoder_pallas.1} parent=0 // loop_pre_header
    _
  $region3: #{decoder_pallas.1} parent=0 // loop_header
    %s14 = sphi 0, %s18
    %p15 = scmp.ge.s32.totalorder %s14, 4
    %s24 = sphi 0, %s26
    %s27 = sphi 0, %s24
    %s28 = sphi 0, %s27
    %s44 = sphi 0, %s28
    %s48 = sphi 0, %s48
    %s50 = sphi 0, %s48
    %s51 = sphi 0, %s50
    %s65 = sphi 0, %s51
    %s69 = sphi 0, %s69
    %s71 = sphi 0, %s69
    %s72 = sphi 0, %s71
    %s86 = sphi 0, %s72
    %s90 = sphi 0, %s90
    %s92 = sphi 0, %s90
    %s93 = sphi 0, %s92
    %s107 = sphi 0, %s93
    %s111 = sphi 0, %s111
    %s113 = sphi 0, %s111
    %s114 = sphi 0, %s113
    %s128 = sphi 0, %s114
    %s132 = sphi 0, %s132
    %s134 = sphi 0, %s132
    %s135 = sphi 0, %s134
    %s149 = sphi 0, %s135
    %s153 = sphi 0, %s153
    %s155 = sphi 0, %s153
    %s156 = sphi 0, %s155
    %s170 = sphi 0, %s156
    %s174 = sphi 0, %s174
    %s176 = sphi 0, %s174
    %s177 = sphi 0, %s176
    %s191 = sphi 0, %s177
    %s197 = sphi 0, %s199
    %s200 = sphi 0, %s197
    %s201 = sphi 0, %s200
    %s217 = sphi 0, %s201
  $region4: #{decoder_pallas.1} parent=0 // loop_header_branch
    %17 = sbr.rel (%p15) target = $region8
  $region5: #{decoder_pallas.1} parent=0 // loop_body
    %s19 = ssub.s32 %s14, 1
    %s20 = ssub.s32 %s14, 2
    %s21 = sadd.s32 %s14, 1
    %s22 = ssub.s32 %s14, %s21
    %p23 = scmp.eq.s32.totalorder %s22, 0
    %s25 = sadd.s32 %s24, 1
    %s26 = scalar_select %p23, %s24, %s25
    %p29 = pneg %p23
    %p30 = scmp.eq.s32.totalorder %s14, 1
    %p31 = por %p29, %p30
    %p32 = scmp.ne.s32.totalorder %s24, %s27
    %p33 = scmp.eq.s32.totalorder %s14, 0
    %p34 = por %p32, %p33
    %p35 = scmp.ne.s32.totalorder %s24, %s27
    %p36 = scmp.eq.s32.totalorder %s19, 1
    %p37 = por %p35, %p36
    %p38 = scmp.ne.s32.totalorder %s27, %s28
    %p39 = scmp.eq.s32.totalorder %s19, 0
    %p40 = por %p38, %p39
    %p41 = scmp.ne.s32.totalorder %s27, %s28
    %p42 = scmp.eq.s32.totalorder %s20, 1
    %p43 = por %p41, %p42
    %p45 = scmp.ne.s32.totalorder %s28, %s44
    %p46 = scmp.eq.s32.totalorder %s20, 0
    %p47 = por %p45, %p46
    %s49 = sadd.s32 %s48, 1
    %p52 = scmp.eq.s32.totalorder %s14, 1
    %p53 = scmp.ne.s32.totalorder %s48, %s50
    %p54 = scmp.eq.s32.totalorder %s14, 0
    %p55 = por %p53, %p54
    %p56 = scmp.ne.s32.totalorder %s48, %s50
    %p57 = scmp.eq.s32.totalorder %s19, 1
    %p58 = por %p56, %p57
    %p59 = scmp.ne.s32.totalorder %s50, %s51
    %p60 = scmp.eq.s32.totalorder %s19, 0
    %p61 = por %p59, %p60
    %p62 = scmp.ne.s32.totalorder %s50, %s51
    %p63 = scmp.eq.s32.totalorder %s20, 1
    %p64 = por %p62, %p63
    %p66 = scmp.ne.s32.totalorder %s51, %s65
    %p67 = scmp.eq.s32.totalorder %s20, 0
    %p68 = por %p66, %p67
    %s70 = sadd.s32 %s69, 1
    %p73 = scmp.eq.s32.totalorder %s14, 1
    %p74 = scmp.ne.s32.totalorder %s69, %s71
    %p75 = scmp.eq.s32.totalorder %s14, 0
    %p76 = por %p74, %p75
    %p77 = scmp.ne.s32.totalorder %s69, %s71
    %p78 = scmp.eq.s32.totalorder %s19, 1
    %p79 = por %p77, %p78
    %p80 = scmp.ne.s32.totalorder %s71, %s72
    %p81 = scmp.eq.s32.totalorder %s19, 0
    %p82 = por %p80, %p81
    %p83 = scmp.ne.s32.totalorder %s71, %s72
    %p84 = scmp.eq.s32.totalorder %s20, 1
    %p85 = por %p83, %p84
    %p87 = scmp.ne.s32.totalorder %s72, %s86
    %p88 = scmp.eq.s32.totalorder %s20, 0
    %p89 = por %p87, %p88
    %s91 = sadd.s32 %s90, 1
    %p94 = scmp.eq.s32.totalorder %s14, 1
    %p95 = scmp.ne.s32.totalorder %s90, %s92
    %p96 = scmp.eq.s32.totalorder %s14, 0
    %p97 = por %p95, %p96
    %p98 = scmp.ne.s32.totalorder %s90, %s92
    %p99 = scmp.eq.s32.totalorder %s19, 1
    %p100 = por %p98, %p99
    %p101 = scmp.ne.s32.totalorder %s92, %s93
    %p102 = scmp.eq.s32.totalorder %s19, 0
    %p103 = por %p101, %p102
    %p104 = scmp.ne.s32.totalorder %s92, %s93
    %p105 = scmp.eq.s32.totalorder %s20, 1
    %p106 = por %p104, %p105
    %p108 = scmp.ne.s32.totalorder %s93, %s107
    %p109 = scmp.eq.s32.totalorder %s20, 0
    %p110 = por %p108, %p109
    %s112 = sadd.s32 %s111, 1
    %p115 = scmp.eq.s32.totalorder %s14, 1
    %p116 = scmp.ne.s32.totalorder %s111, %s113
    %p117 = scmp.eq.s32.totalorder %s14, 0
    %p118 = por %p116, %p117
    %p119 = scmp.ne.s32.totalorder %s111, %s113
    %p120 = scmp.eq.s32.totalorder %s19, 1
    %p121 = por %p119, %p120
    %p122 = scmp.ne.s32.totalorder %s113, %s114
    %p123 = scmp.eq.s32.totalorder %s19, 0
    %p124 = por %p122, %p123
    %p125 = scmp.ne.s32.totalorder %s113, %s114
    %p126 = scmp.eq.s32.totalorder %s20, 1
    %p127 = por %p125, %p126
    %p129 = scmp.ne.s32.totalorder %s114, %s128
    %p130 = scmp.eq.s32.totalorder %s20, 0
    %p131 = por %p129, %p130
    %s133 = sadd.s32 %s132, 1
    %p136 = scmp.eq.s32.totalorder %s14, 1
    %p137 = scmp.ne.s32.totalorder %s132, %s134
    %p138 = scmp.eq.s32.totalorder %s14, 0
    %p139 = por %p137, %p138
    %p140 = scmp.ne.s32.totalorder %s132, %s134
    %p141 = scmp.eq.s32.totalorder %s19, 1
    %p142 = por %p140, %p141
    %p143 = scmp.ne.s32.totalorder %s134, %s135
    %p144 = scmp.eq.s32.totalorder %s19, 0
    %p145 = por %p143, %p144
    %p146 = scmp.ne.s32.totalorder %s134, %s135
    %p147 = scmp.eq.s32.totalorder %s20, 1
    %p148 = por %p146, %p147
    %p150 = scmp.ne.s32.totalorder %s135, %s149
    %p151 = scmp.eq.s32.totalorder %s20, 0
    %p152 = por %p150, %p151
    %s154 = sadd.s32 %s153, 1
    %p157 = scmp.eq.s32.totalorder %s14, 1
    %p158 = scmp.ne.s32.totalorder %s153, %s155
    %p159 = scmp.eq.s32.totalorder %s14, 0
    %p160 = por %p158, %p159
    %p161 = scmp.ne.s32.totalorder %s153, %s155
    %p162 = scmp.eq.s32.totalorder %s19, 1
    %p163 = por %p161, %p162
    %p164 = scmp.ne.s32.totalorder %s155, %s156
    %p165 = scmp.eq.s32.totalorder %s19, 0
    %p166 = por %p164, %p165
    %p167 = scmp.ne.s32.totalorder %s155, %s156
    %p168 = scmp.eq.s32.totalorder %s20, 1
    %p169 = por %p167, %p168
    %p171 = scmp.ne.s32.totalorder %s156, %s170
    %p172 = scmp.eq.s32.totalorder %s20, 0
    %p173 = por %p171, %p172
    %s175 = sadd.s32 %s174, 1
    %p178 = scmp.eq.s32.totalorder %s14, 1
    %p179 = scmp.ne.s32.totalorder %s174, %s176
    %p180 = scmp.eq.s32.totalorder %s14, 0
    %p181 = por %p179, %p180
    %p182 = scmp.ne.s32.totalorder %s174, %s176
    %p183 = scmp.eq.s32.totalorder %s19, 1
    %p184 = por %p182, %p183
    %p185 = scmp.ne.s32.totalorder %s176, %s177
    %p186 = scmp.eq.s32.totalorder %s19, 0
    %p187 = por %p185, %p186
    %p188 = scmp.ne.s32.totalorder %s176, %s177
    %p189 = scmp.eq.s32.totalorder %s20, 1
    %p190 = por %p188, %p189
    %p192 = scmp.ne.s32.totalorder %s177, %s191
    %p193 = scmp.eq.s32.totalorder %s20, 0
    %p194 = por %p192, %p193
    %s195 = ssub.s32 %s14, %s21
    %p196 = scmp.eq.s32.totalorder %s195, 0
    %s198 = sadd.s32 %s197, 1
    %s199 = scalar_select %p196, %s197, %s198
    %p202 = pneg %p196
    %p203 = scmp.eq.s32.totalorder %s14, 1
    %p204 = por %p202, %p203
    %p205 = scmp.ne.s32.totalorder %s197, %s200
    %p206 = scmp.eq.s32.totalorder %s14, 0
    %p207 = por %p205, %p206
    %p208 = scmp.ne.s32.totalorder %s197, %s200
    %p209 = scmp.eq.s32.totalorder %s19, 1
    %p210 = por %p208, %p209
    %p211 = scmp.ne.s32.totalorder %s200, %s201
    %p212 = scmp.eq.s32.totalorder %s19, 0
    %p213 = por %p211, %p212
    %p214 = scmp.ne.s32.totalorder %s200, %s201
    %p215 = scmp.eq.s32.totalorder %s20, 1
    %p216 = por %p214, %p215
    %p218 = scmp.ne.s32.totalorder %s201, %s217
    %p219 = scmp.eq.s32.totalorder %s20, 0
    %p220 = por %p218, %p219
    %p221 = scmp.le.s32.totalorder 1, %s14
    %p222 = scmp.lt.s32.totalorder %s14, 3
    %p223 = pnand %p221, %p222
    %p224 = pneg %p223
    // Predicated region
    $region9: #{decoder_pallas.1} parent=5 // pred_check
      _
    $region10: #{decoder_pallas.1} parent=5 // pred_check_branch
      %226 = sbr.rel (%p223) target = $region12
    $region11: #{decoder_pallas.1} parent=5 // pred_region
      %s227 = ssub.s32 %s14, 1
      // Predicated region
      $region13: #{decoder_pallas.1} parent=11 // pred_check
        %p228 = pneg %p61
      $region14: #{decoder_pallas.1} parent=11 // pred_check_branch
        %230 = sbr.rel (%p228) target = $region16
      $region15: #{decoder_pallas.1} parent=11 // pred_region
        _
      $region16: #{decoder_pallas.1} parent=11 // pred_fallthru
        _
      // Predicated region
      $region17: #{decoder_pallas.1} parent=11 // pred_check
        %p231 = pneg %p82
      $region18: #{decoder_pallas.1} parent=11 // pred_check_branch
        %233 = sbr.rel (%p231) target = $region20
      $region19: #{decoder_pallas.1} parent=11 // pred_region
        _
      $region20: #{decoder_pallas.1} parent=11 // pred_fallthru
        _
      // Predicated region
      $region21: #{decoder_pallas.1} parent=11 // pred_check
        %p234 = pneg %p103
      $region22: #{decoder_pallas.1} parent=11 // pred_check_branch
        %236 = sbr.rel (%p234) target = $region24
      $region23: #{decoder_pallas.1} parent=11 // pred_region
        _
      $region24: #{decoder_pallas.1} parent=11 // pred_fallthru
        _
      // Predicated region
      $region25: #{decoder_pallas.1} parent=11 // pred_check
        %p237 = pneg %p124
      $region26: #{decoder_pallas.1} parent=11 // pred_check_branch
        %239 = sbr.rel (%p237) target = $region28
      $region27: #{decoder_pallas.1} parent=11 // pred_region
        _
      $region28: #{decoder_pallas.1} parent=11 // pred_fallthru
        _
      // Predicated region
      $region29: #{decoder_pallas.1} parent=11 // pred_check
        %p240 = pneg %p145
      $region30: #{decoder_pallas.1} parent=11 // pred_check_branch
        %242 = sbr.rel (%p240) target = $region32
      $region31: #{decoder_pallas.1} parent=11 // pred_region
        _
      $region32: #{decoder_pallas.1} parent=11 // pred_fallthru
        _
      // Predicated region
      $region33: #{decoder_pallas.1} parent=11 // pred_check
        %p243 = pneg %p166
      $region34: #{decoder_pallas.1} parent=11 // pred_check_branch
        %245 = sbr.rel (%p243) target = $region36
      $region35: #{decoder_pallas.1} parent=11 // pred_region
        _
      $region36: #{decoder_pallas.1} parent=11 // pred_fallthru
        _
      // Predicated region
      $region37: #{decoder_pallas.1} parent=11 // pred_check
        %p246 = pneg %p187
      $region38: #{decoder_pallas.1} parent=11 // pred_check_branch
        %248 = sbr.rel (%p246) target = $region40
      $region39: #{decoder_pallas.1} parent=11 // pred_region
        _
      $region40: #{decoder_pallas.1} parent=11 // pred_fallthru
        _
    $region12: #{decoder_pallas.1} parent=5 // pred_fallthru
      _
    %p249 = scmp.lt.s32.totalorder %s14, 2
    // Predicated region
    $region41: #{decoder_pallas.1} parent=5 // pred_check
      %p250 = pneg %p249
    $region42: #{decoder_pallas.1} parent=5 // pred_check_branch
      %252 = sbr.rel (%p250) target = $region44
    $region43: #{decoder_pallas.1} parent=5 // pred_region
      // Predicated region
      $region45: #{decoder_pallas.1} parent=43 // pred_check
        %p253 = pneg %p34
      $region46: #{decoder_pallas.1} parent=43 // pred_check_branch
        %255 = sbr.rel (%p253) target = $region48
      $region47: #{decoder_pallas.1} parent=43 // pred_region
        %p256 = scmp.lt.s32.totalorder %s14, 1
        %s257 = scalar_select %p256, %s14, 1
        %s258 = smul.addr %s257, 4
        %s259 = smul.addr %s258, 8
        %s260 = scalar_lea.vmem %s0, %s259
      $region48: #{decoder_pallas.1} parent=43 // pred_fallthru
        _
    $region44: #{decoder_pallas.1} parent=5 // pred_fallthru
      _
    %p261 = scmp.le.s32.totalorder 1, %s14
    %p262 = scmp.lt.s32.totalorder %s14, 3
    %p263 = pnand %p261, %p262
    %p264 = pneg %p263
    // Predicated region
    $region49: #{decoder_pallas.1} parent=5 // pred_check
      _
    $region50: #{decoder_pallas.1} parent=5 // pred_check_branch
      %266 = sbr.rel (%p263) target = $region52
    $region51: #{decoder_pallas.1} parent=5 // pred_region
      %s267 = ssub.s32 %s14, 1
      %p268 = scmp.lt.s32.totalorder %s19, 1
      %s269 = scalar_select %p268, %s19, 1
      %s270 = smul.addr %s269, 4
      %s271 = smul.addr %s270, 8
      %s272 = scalar_lea.vmem %s0, %s271
      %p273 = pneg %p40
      %p274 = pneg %p37
      %p275 = pneg %p61
      %p276 = pneg %p58
      %p277 = pneg %p82
      %p278 = pneg %p79
      %p279 = pneg %p103
      %p280 = pneg %p100
      %p281 = pneg %p124
      %p282 = pneg %p121
      %p283 = pneg %p145
      %p284 = pneg %p142
      %p285 = pneg %p166
      %p286 = pneg %p163
      %p287 = pneg %p187
      %p288 = pneg %p184
      %p289 = pneg %p213
      %p290 = pneg %p210
      %p291 = scmp.lt.s32.totalorder %s19, 1
      %s292 = scalar_select %p291, %s19, 1
      %s293 = smul.addr %s292, 8
      %s294 = smul.addr %s293, 8
      %s295 = scalar_lea.vmem %s8, %s294
      %p296 = scmp.lt.s32.totalorder %s19, 1
      %s297 = scalar_select %p296, %s19, 1
      %s298 = smul.addr %s297, 4
      %s299 = smul.addr %s298, 8
      %s300 = scalar_lea.vmem %s0, %s299
      %p301 = scmp.lt.s32.totalorder %s19, 1
      %s302 = scalar_select %p301, %s19, 1
      %s303 = smul.addr %s302, 8
      %s304 = smul.addr %s303, 8
      %s305 = scalar_lea.vmem %s8, %s304
      %v306 = vld [vmem:[%s1] sm:$0xff]
      %v307 = vld [vmem:[%s300] sm:$0xff]
      %v308 = vld [vmem:[%s300 + $0x8] sm:$0xff]
      %v309 = vld [vmem:[%s300 + $0x10] sm:$0xff]
      %v310 = vld [vmem:[%s300 + $0x18] sm:$0xff]
      %v311 = vld [vmem:[%s2] sm:$0xff]
      %313 = vset.pattern.permute.xlu0 0
      %314 = vperm.xlu0 %313, %v311
      %v315 = vpop.permute.xlu0 %314
      %vm317 = vcmask 130048
      %v319 = vsel %vm317, %v306, 0
      %321 = vmatprep.subr.mxu0 0.0
      %322 = vmatpush1.msra.mxu0 0.0
      %323 = vmatprep.subr.mxu0 0.0
      %324 = vmatpush1.msra.mxu0 0.0
      %325 = vmatprep.subr.mxu0 0.0
      %326 = vmatpush1.msra.mxu0 0.0
      %327 = vmatprep.subr.mxu0 0.0
      %328 = vmatpush1.msra.mxu0 0.0
      %329 = vmatprep.subr.mxu0 0.0
      %330 = vmatpush1.msra.mxu0 0.0
      %331 = vmatprep.subr.mxu0 0.0
      %332 = vmatpush1.msra.mxu0 0.0
      %333 = vmatprep.subr.mxu0 0.0
      %334 = vmatpush1.msra.mxu0 0.0
      %335 = vmatprep.subr.mxu0 0.0
      %336 = vmatpush1.msra.mxu0 0.0
      %337 = vmatprep.subr.mxu0 0.0
      %338 = vmatpush1.msra.mxu0 0.0
      %339 = vmatprep.subr.mxu0 0.0
      %340 = vmatpush1.msra.mxu0 0.0
      %341 = vmatprep.subr.mxu0 0.0
      %342 = vmatpush1.msra.mxu0 0.0
      %343 = vmatprep.subr.mxu0 0.0
      %344 = vmatpush1.msra.mxu0 0.0
      %345 = vmatprep.subr.mxu0 0.0
      %346 = vmatpush1.msra.mxu0 0.0
      %347 = vmatprep.subr.mxu0 0.0
      %348 = vmatpush1.msra.mxu0 0.0
      %349 = vmatprep.subr.mxu0 %v310
      %350 = vmatpush1.msra.mxu0 %v309
      %351 = vmatprep.subr.mxu0 %v308
      %352 = vmatpush1.msra.mxu0 %v307
      %353 = vmatprep.subr.mxu0 0.0
      %354 = vmatpush2.msra.mxu0 0.0
      %355 = vmatprep.subr.mxu0 0.0
      %356 = vmatpush2.msra.mxu0 0.0
      %357 = vmatprep.subr.mxu0 0.0
      %358 = vmatpush2.msra.mxu0 0.0
      %359 = vmatprep.subr.mxu0 0.0
      %360 = vmatpush2.msra.mxu0 0.0
      %361 = vmatprep.subr.mxu0 0.0
      %362 = vmatpush2.msra.mxu0 0.0
      %363 = vmatprep.subr.mxu0 0.0
      %364 = vmatpush2.msra.mxu0 0.0
      %365 = vmatprep.subr.mxu0 0.0
      %366 = vmatpush2.msra.mxu0 0.0
      %367 = vmatprep.subr.mxu0 0.0
      %368 = vmatpush2.msra.mxu0 0.0
      %369 = vmatprep.subr.mxu0 0.0
      %370 = vmatpush2.msra.mxu0 0.0
      %371 = vmatprep.subr.mxu0 0.0
      %372 = vmatpush2.msra.mxu0 0.0
      %373 = vmatprep.subr.mxu0 0.0
      %374 = vmatpush2.msra.mxu0 0.0
      %375 = vmatprep.subr.mxu0 0.0
      %376 = vmatpush2.msra.mxu0 0.0
      %377 = vmatprep.subr.mxu0 0.0
      %378 = vmatpush2.msra.mxu0 0.0
      %379 = vmatprep.subr.mxu0 0.0
      %380 = vmatpush2.msra.mxu0 0.0
      %381 = vmatprep.subr.mxu0 0.0
      %382 = vmatpush2.msra.mxu0 0.0
      %383 = vmatprep.subr.mxu0 0.0
      %384 = vmatpush2.msra.mxu0 0.0
      %385 = vmatprep.mubr.f32.mxu0 0.0
      %386 = vmatmul.mubr.f32.gmra.mxu0 %v319
      %v387 = vpop.f32.mrf.mxu0
      %v388 = vadd.f32 %v315, %v387
      %v389 = vpop.f32.mrf.mxu0
      %v390 = vadd.f32 %v315, %v389
      %391 = vdwg.mxu0
      %vm392 = vcmp.gt.f32.partialorder %v388, 0.0
      %vm393 = vcmp.gt.f32.partialorder %v390, 0.0
      %v394 = vmul.f32 %v388, 0.1
      %v395 = vmul.f32 %v390, 0.1
      %v396 = vsel %vm392, %v388, %v394
      %v397 = vsel %vm393, %v390, %v395
      %398 = vrot.lane.b32.xlu0 %v396, 127
      %v399 = vpop.permute.xlu0 %398
      %400 = vrot.lane.b32.xlu0 %v397, 127
      %v401 = vpop.permute.xlu0 %400
      %v402 = vlaneseq
      %v403 = vand.u32 %v402, 127
      %vm404 = vcmp.lt.s32.totalorder %v403, 127
      %v405 = vsel %vm404, %v399, %v401
      %v406 = vsel %vm404, %v401, %v399
      %v407 = vld [vmem:[%s7] sm:$0xff]
      %v408 = vld [vmem:[%s7 + $0x8] sm:$0xff]
      %v409 = vmul.f32 %v405, %v407
      %v410 = vmul.f32 %v406, %v408
      %411 = vrot.lane.b32.xlu0 %v396, 112
      %v412 = vpop.permute.xlu0 %411
      %413 = vrot.lane.b32.xlu0 %v397, 112
      %v414 = vpop.permute.xlu0 %413
      %vm415 = vcmp.lt.s32.totalorder %v403, 112
      %v416 = vsel %vm415, %v412, %v414
      %v417 = vsel %vm415, %v414, %v412
      %s418 = scalar_lea.vmem %s7, 16
      %v419 = vld [vmem:[%s418] sm:$0xff]
      %v420 = vld [vmem:[%s418 + $0x8] sm:$0xff]
      %v421 = vmul.f32 %v416, %v419
      %v422 = vmul.f32 %v417, %v420
      %423 = vrot.lane.b32.xlu0 %v396, 111
      %v424 = vpop.permute.xlu0 %423
      %425 = vrot.lane.b32.xlu0 %v397, 111
      %v426 = vpop.permute.xlu0 %425
      %vm427 = vcmp.lt.s32.totalorder %v403, 111
      %v428 = vsel %vm427, %v424, %v426
      %v429 = vsel %vm427, %v426, %v424
      %s430 = scalar_lea.vmem %s7, 32
      %v431 = vld [vmem:[%s430] sm:$0xff]
      %v432 = vld [vmem:[%s430 + $0x8] sm:$0xff]
      %v433 = vmul.f32 %v428, %v431
      %v434 = vmul.f32 %v429, %v432
      %v435 = vld [vmem:[%s3] sm:$0xff]
      %v436 = vld [vmem:[%s3 + $0x8] sm:$0xff]
      %v437 = vld [vmem:[%s3 + $0x10] sm:$0xff]
      %v438 = vld [vmem:[%s3 + $0x18] sm:$0xff]
      %v439 = vld [vmem:[%s4] sm:$0xff]
      %v440 = vld [vmem:[%s4 + $0x8] sm:$0xff]
      %v441 = vld [vmem:[%s4 + $0x10] sm:$0xff]
      %v442 = vld [vmem:[%s4 + $0x18] sm:$0xff]
      %444 = vset.pattern.permute.xlu0 0
      %445 = vperm.xlu0 %444, %v439
      %v446 = vpop.permute.xlu0 %445
      %449 = vset.pattern.permute.xlu0 0
      %450 = vperm.xlu0 %449, %v440
      %v451 = vpop.permute.xlu0 %450
      %454 = vset.pattern.permute.xlu0 0
      %455 = vperm.xlu0 %454, %v441
      %v456 = vpop.permute.xlu0 %455
      %459 = vset.pattern.permute.xlu0 0
      %460 = vperm.xlu0 %459, %v442
      %v461 = vpop.permute.xlu0 %460
      %vm463 = vcmask 261120
      %v465 = vsel %vm463, %v435, 0
      %v468 = vsel %vm463, %v436, 0
      %v471 = vsel %vm463, %v437, 0
      %v474 = vsel %vm463, %v438, 0
      %476 = vmatprep.subr.mxu0 0.0
      %477 = vmatpush1.msra.mxu0 0.0
      %478 = vmatprep.subr.mxu0 0.0
      %479 = vmatpush1.msra.mxu0 0.0
      %480 = vmatprep.subr.mxu0 0.0
      %481 = vmatpush1.msra.mxu0 0.0
      %482 = vmatprep.subr.mxu0 0.0
      %483 = vmatpush1.msra.mxu0 0.0
      %484 = vmatprep.subr.mxu0 0.0
      %485 = vmatpush1.msra.mxu0 0.0
      %486 = vmatprep.subr.mxu0 0.0
      %487 = vmatpush1.msra.mxu0 0.0
      %488 = vmatprep.subr.mxu0 0.0
      %489 = vmatpush1.msra.mxu0 0.0
      %490 = vmatprep.subr.mxu0 0.0
      %491 = vmatpush1.msra.mxu0 0.0
      %492 = vmatprep.subr.mxu0 0.0
      %493 = vmatpush1.msra.mxu0 0.0
      %494 = vmatprep.subr.mxu0 0.0
      %495 = vmatpush1.msra.mxu0 0.0
      %496 = vmatprep.subr.mxu0 0.0
      %497 = vmatpush1.msra.mxu0 0.0
      %498 = vmatprep.subr.mxu0 0.0
      %499 = vmatpush1.msra.mxu0 0.0
      %500 = vmatprep.subr.mxu0 %v434
      %501 = vmatpush1.msra.mxu0 %v433
      %502 = vmatprep.subr.mxu0 %v422
      %503 = vmatpush1.msra.mxu0 %v421
      %504 = vmatprep.subr.mxu0 %v410
      %505 = vmatpush1.msra.mxu0 %v409
      %506 = vmatprep.subr.mxu0 %v397
      %507 = vmatpush1.msra.mxu0 %v396
      %508 = vmatprep.subr.mxu0 0.0
      %509 = vmatpush2.msra.mxu0 0.0
      %510 = vmatprep.subr.mxu0 0.0
      %511 = vmatpush2.msra.mxu0 0.0
      %512 = vmatprep.subr.mxu0 0.0
      %513 = vmatpush2.msra.mxu0 0.0
      %514 = vmatprep.subr.mxu0 0.0
      %515 = vmatpush2.msra.mxu0 0.0
      %516 = vmatprep.subr.mxu0 0.0
      %517 = vmatpush2.msra.mxu0 0.0
      %518 = vmatprep.subr.mxu0 0.0
      %519 = vmatpush2.msra.mxu0 0.0
      %520 = vmatprep.subr.mxu0 0.0
      %521 = vmatpush2.msra.mxu0 0.0
      %522 = vmatprep.subr.mxu0 0.0
      %523 = vmatpush2.msra.mxu0 0.0
      %524 = vmatprep.subr.mxu0 0.0
      %525 = vmatpush2.msra.mxu0 0.0
      %526 = vmatprep.subr.mxu0 0.0
      %527 = vmatpush2.msra.mxu0 0.0
      %528 = vmatprep.subr.mxu0 0.0
      %529 = vmatpush2.msra.mxu0 0.0
      %530 = vmatprep.subr.mxu0 0.0
      %531 = vmatpush2.msra.mxu0 0.0
      %532 = vmatprep.subr.mxu0 0.0
      %533 = vmatpush2.msra.mxu0 0.0
      %534 = vmatprep.subr.mxu0 0.0
      %535 = vmatpush2.msra.mxu0 0.0
      %536 = vmatprep.subr.mxu0 0.0
      %537 = vmatpush2.msra.mxu0 0.0
      %538 = vmatprep.subr.mxu0 0.0
      %539 = vmatpush2.msra.mxu0 0.0
      %540 = vmatprep.mubr.f32.mxu0 0.0
      %541 = vmatmul.mubr.f32.gmra.mxu0 %v465
      %v542 = vpop.f32.mrf.mxu0
      %v543 = vadd.f32 %v446, %v542
      %v544 = vpop.f32.mrf.mxu0
      %v545 = vadd.f32 %v446, %v544
      %546 = vmatprep.mubr.f32.mxu0 0.0
      %547 = vmatmul.mubr.f32.gmra.mxu0 %v468
      %v548 = vpop.f32.mrf.mxu0
      %v549 = vadd.f32 %v451, %v548
      %v550 = vpop.f32.mrf.mxu0
      %v551 = vadd.f32 %v451, %v550
      %552 = vmatprep.mubr.f32.mxu0 0.0
      %553 = vmatmul.mubr.f32.gmra.mxu0 %v471
      %v554 = vpop.f32.mrf.mxu0
      %v555 = vadd.f32 %v456, %v554
      %v556 = vpop.f32.mrf.mxu0
      %v557 = vadd.f32 %v456, %v556
      %558 = vmatprep.mubr.f32.mxu0 0.0
      %559 = vmatmul.mubr.f32.gmra.mxu0 %v474
      %v560 = vpop.f32.mrf.mxu0
      %v561 = vadd.f32 %v461, %v560
      %v562 = vpop.f32.mrf.mxu0
      %v563 = vadd.f32 %v461, %v562
      %564 = vdwg.mxu0
      %vm565 = vcmp.gt.f32.partialorder %v543, 0.0
      %vm566 = vcmp.gt.f32.partialorder %v545, 0.0
      %vm567 = vcmp.gt.f32.partialorder %v549, 0.0
      %vm568 = vcmp.gt.f32.partialorder %v551, 0.0
      %vm569 = vcmp.gt.f32.partialorder %v555, 0.0
      %vm570 = vcmp.gt.f32.partialorder %v557, 0.0
      %vm571 = vcmp.gt.f32.partialorder %v561, 0.0
      %vm572 = vcmp.gt.f32.partialorder %v563, 0.0
      %v573 = vmul.f32 %v543, 0.1
      %v574 = vmul.f32 %v545, 0.1
      %v575 = vmul.f32 %v549, 0.1
      %v576 = vmul.f32 %v551, 0.1
      %v577 = vmul.f32 %v555, 0.1
      %v578 = vmul.f32 %v557, 0.1
      %v579 = vmul.f32 %v561, 0.1
      %v580 = vmul.f32 %v563, 0.1
      %v581 = vsel %vm565, %v543, %v573
      %v582 = vsel %vm566, %v545, %v574
      %v583 = vsel %vm567, %v549, %v575
      %v584 = vsel %vm568, %v551, %v576
      %v585 = vsel %vm569, %v555, %v577
      %v586 = vsel %vm570, %v557, %v578
      %v587 = vsel %vm571, %v561, %v579
      %v588 = vsel %vm572, %v563, %v580
      %v589 = vld [vmem:[%s5] sm:$0xff]
      %v590 = vld [vmem:[%s5 + $0x8] sm:$0xff]
      %v591 = vld [vmem:[%s5 + $0x10] sm:$0xff]
      %v592 = vld [vmem:[%s5 + $0x18] sm:$0xff]
      %v593 = vld [vmem:[%s6] sm:$0xff]
      %v594 = vld [vmem:[%s6 + $0x8] sm:$0xff]
      %v595 = vld [vmem:[%s6 + $0x10] sm:$0xff]
      %v596 = vld [vmem:[%s6 + $0x18] sm:$0xff]
      %598 = vset.pattern.permute.xlu0 0
      %599 = vperm.xlu0 %598, %v593
      %v600 = vpop.permute.xlu0 %599
      %603 = vset.pattern.permute.xlu0 0
      %604 = vperm.xlu0 %603, %v594
      %v605 = vpop.permute.xlu0 %604
      %608 = vset.pattern.permute.xlu0 0
      %609 = vperm.xlu0 %608, %v595
      %v610 = vpop.permute.xlu0 %609
      %613 = vset.pattern.permute.xlu0 0
      %614 = vperm.xlu0 %613, %v596
      %v615 = vpop.permute.xlu0 %614
      %v618 = vsel %vm463, %v589, 0
      %v621 = vsel %vm463, %v590, 0
      %v624 = vsel %vm463, %v591, 0
      %v627 = vsel %vm463, %v592, 0
      %629 = vmatprep.subr.mxu0 0.0
      %630 = vmatpush1.msra.mxu0 0.0
      %631 = vmatprep.subr.mxu0 0.0
      %632 = vmatpush1.msra.mxu0 0.0
      %633 = vmatprep.subr.mxu0 0.0
      %634 = vmatpush1.msra.mxu0 0.0
      %635 = vmatprep.subr.mxu0 0.0
      %636 = vmatpush1.msra.mxu0 0.0
      %637 = vmatprep.subr.mxu0 0.0
      %638 = vmatpush1.msra.mxu0 0.0
      %639 = vmatprep.subr.mxu0 0.0
      %640 = vmatpush1.msra.mxu0 0.0
      %641 = vmatprep.subr.mxu0 0.0
      %642 = vmatpush1.msra.mxu0 0.0
      %643 = vmatprep.subr.mxu0 0.0
      %644 = vmatpush1.msra.mxu0 0.0
      %645 = vmatprep.subr.mxu0 0.0
      %646 = vmatpush1.msra.mxu0 0.0
      %647 = vmatprep.subr.mxu0 0.0
      %648 = vmatpush1.msra.mxu0 0.0
      %649 = vmatprep.subr.mxu0 0.0
      %650 = vmatpush1.msra.mxu0 0.0
      %651 = vmatprep.subr.mxu0 0.0
      %652 = vmatpush1.msra.mxu0 0.0
      %653 = vmatprep.subr.mxu0 %v588
      %654 = vmatpush1.msra.mxu0 %v587
      %655 = vmatprep.subr.mxu0 %v586
      %656 = vmatpush1.msra.mxu0 %v585
      %657 = vmatprep.subr.mxu0 %v584
      %658 = vmatpush1.msra.mxu0 %v583
      %659 = vmatprep.subr.mxu0 %v582
      %660 = vmatpush1.msra.mxu0 %v581
      %661 = vmatprep.subr.mxu0 0.0
      %662 = vmatpush2.msra.mxu0 0.0
      %663 = vmatprep.subr.mxu0 0.0
      %664 = vmatpush2.msra.mxu0 0.0
      %665 = vmatprep.subr.mxu0 0.0
      %666 = vmatpush2.msra.mxu0 0.0
      %667 = vmatprep.subr.mxu0 0.0
      %668 = vmatpush2.msra.mxu0 0.0
      %669 = vmatprep.subr.mxu0 0.0
      %670 = vmatpush2.msra.mxu0 0.0
      %671 = vmatprep.subr.mxu0 0.0
      %672 = vmatpush2.msra.mxu0 0.0
      %673 = vmatprep.subr.mxu0 0.0
      %674 = vmatpush2.msra.mxu0 0.0
      %675 = vmatprep.subr.mxu0 0.0
      %676 = vmatpush2.msra.mxu0 0.0
      %677 = vmatprep.subr.mxu0 0.0
      %678 = vmatpush2.msra.mxu0 0.0
      %679 = vmatprep.subr.mxu0 0.0
      %680 = vmatpush2.msra.mxu0 0.0
      %681 = vmatprep.subr.mxu0 0.0
      %682 = vmatpush2.msra.mxu0 0.0
      %683 = vmatprep.subr.mxu0 0.0
      %684 = vmatpush2.msra.mxu0 0.0
      %685 = vmatprep.subr.mxu0 0.0
      %686 = vmatpush2.msra.mxu0 0.0
      %687 = vmatprep.subr.mxu0 0.0
      %688 = vmatpush2.msra.mxu0 0.0
      %689 = vmatprep.subr.mxu0 0.0
      %690 = vmatpush2.msra.mxu0 0.0
      %691 = vmatprep.subr.mxu0 0.0
      %692 = vmatpush2.msra.mxu0 0.0
      %693 = vmatprep.mubr.f32.mxu0 0.0
      %694 = vmatmul.mubr.f32.gmra.mxu0 %v618
      %v695 = vpop.f32.mrf.mxu0
      %v696 = vadd.f32 %v600, %v695
      %v697 = vpop.f32.mrf.mxu0
      %v698 = vadd.f32 %v600, %v697
      %699 = vmatprep.mubr.f32.mxu0 0.0
      %700 = vmatmul.mubr.f32.gmra.mxu0 %v621
      %v701 = vpop.f32.mrf.mxu0
      %v702 = vadd.f32 %v605, %v701
      %v703 = vpop.f32.mrf.mxu0
      %v704 = vadd.f32 %v605, %v703
      %705 = vmatprep.mubr.f32.mxu0 0.0
      %706 = vmatmul.mubr.f32.gmra.mxu0 %v624
      %v707 = vpop.f32.mrf.mxu0
      %v708 = vadd.f32 %v610, %v707
      %v709 = vpop.f32.mrf.mxu0
      %v710 = vadd.f32 %v610, %v709
      %711 = vmatprep.mubr.f32.mxu0 0.0
      %712 = vmatmul.mubr.f32.gmra.mxu0 %v627
      %v713 = vpop.f32.mrf.mxu0
      %v714 = vadd.f32 %v615, %v713
      %v715 = vpop.f32.mrf.mxu0
      %v716 = vadd.f32 %v615, %v715
      %717 = vdwg.mxu0
      %vm718 = vcmp.gt.f32.partialorder %v696, 0.0
      %vm719 = vcmp.gt.f32.partialorder %v698, 0.0
      %vm720 = vcmp.gt.f32.partialorder %v702, 0.0
      %vm721 = vcmp.gt.f32.partialorder %v704, 0.0
      %vm722 = vcmp.gt.f32.partialorder %v708, 0.0
      %vm723 = vcmp.gt.f32.partialorder %v710, 0.0
      %vm724 = vcmp.gt.f32.partialorder %v714, 0.0
      %vm725 = vcmp.gt.f32.partialorder %v716, 0.0
      %v726 = vmul.f32 %v696, 0.1
      %v727 = vmul.f32 %v698, 0.1
      %v728 = vmul.f32 %v702, 0.1
      %v729 = vmul.f32 %v704, 0.1
      %v730 = vmul.f32 %v708, 0.1
      %v731 = vmul.f32 %v710, 0.1
      %v732 = vmul.f32 %v714, 0.1
      %v733 = vmul.f32 %v716, 0.1
      %v734 = vsel %vm718, %v696, %v726
      %v735 = vsel %vm719, %v698, %v727
      %v736 = vsel %vm720, %v702, %v728
      %v737 = vsel %vm721, %v704, %v729
      %v738 = vsel %vm722, %v708, %v730
      %v739 = vsel %vm723, %v710, %v731
      %v740 = vsel %vm724, %v714, %v732
      %v741 = vsel %vm725, %v716, %v733
      %742 = vst [vmem:[%s305] sm:$0xff] %v734
      %743 = vst [vmem:[%s305 + $0x8] sm:$0xff] %v735
      %744 = vst [vmem:[%s305 + $0x10] sm:$0xff] %v736
      %745 = vst [vmem:[%s305 + $0x18] sm:$0xff] %v737
      %746 = vst [vmem:[%s305 + $0x20] sm:$0xff] %v738
      %747 = vst [vmem:[%s305 + $0x28] sm:$0xff] %v739
      %748 = vst [vmem:[%s305 + $0x30] sm:$0xff] %v740
      %749 = vst [vmem:[%s305 + $0x38] sm:$0xff] %v741
      %p750 = scmp.lt.s32.totalorder %s19, 1
      %s751 = scalar_select %p750, %s19, 1
      %s752 = smul.addr %s751, 8
      %s753 = smul.addr %s752, 8
      %s754 = scalar_lea.vmem %s8, %s753
      // Predicated region
      $region53: #{decoder_pallas.1} parent=51 // pred_check
        %p755 = pneg %p210
      $region54: #{decoder_pallas.1} parent=51 // pred_check_branch
        %757 = sbr.rel (%p755) target = $region56
      $region55: #{decoder_pallas.1} parent=51 // pred_region
        _
      $region56: #{decoder_pallas.1} parent=51 // pred_fallthru
        _
    $region52: #{decoder_pallas.1} parent=5 // pred_fallthru
      _
    %p758 = scmp.le.s32.totalorder 2, %s14
    // Predicated region
    $region57: #{decoder_pallas.1} parent=5 // pred_check
      %p759 = pneg %p758
    $region58: #{decoder_pallas.1} parent=5 // pred_check_branch
      %761 = sbr.rel (%p759) target = $region60
    $region59: #{decoder_pallas.1} parent=5 // pred_region
      %s762 = ssub.s32 %s14, 2
      // Predicated region
      $region61: #{decoder_pallas.1} parent=59 // pred_check
        %p763 = pneg %p216
      $region62: #{decoder_pallas.1} parent=59 // pred_check_branch
        %765 = sbr.rel (%p763) target = $region64
      $region63: #{decoder_pallas.1} parent=59 // pred_region
        %p766 = scmp.lt.s32.totalorder %s20, 1
        %s767 = scalar_select %p766, %s20, 1
        %s768 = smul.addr %s767, 8
        %s769 = smul.addr %s768, 8
        %s770 = scalar_lea.vmem %s8, %s769
      $region64: #{decoder_pallas.1} parent=59 // pred_fallthru
        _
    $region60: #{decoder_pallas.1} parent=5 // pred_fallthru
      _
  $region6: #{decoder_pallas.1} parent=0 // loop_footer
    %s18 = sadd.s32 1, %s14
  $region7: #{decoder_pallas.1} parent=0 // loop_footer_branch
    %13 = sbr.rel target = $region3
  $region8: #{decoder_pallas.1} parent=0 // loop_exit
    _

</llo_original>
